<compile_context>
chip_gen: v5e
topology: v5e:2x2
jax: 0.10.0
libtpu: 0.0.40
codegen_flags: <defaults>
</compile_context>

<pallas_src>
import jax
import jax.numpy as jnp
from jax.experimental import pallas as pl
from jax.experimental.pallas import tpu as pltpu


def _mlp_kernel(x_ref, w1_ref, b1_ref, w2_ref, b2_ref, o_ref):
    # x tile arrives f32; cast to bf16 for the MXU (VPU cast, hidden under DMA).
    x = x_ref[...].astype(jnp.bfloat16)
    # fc1: [tm, D] @ [D, Hp] -> [tm, Hp], f32 accumulation.
    h = jnp.dot(x, w1_ref[...], preferred_element_type=jnp.float32)
    # bias + ReLU in f32 (VPU)
    h = jnp.maximum(h + b1_ref[...], 0.0)
    # fc2: [tm, Hp] @ [Hp, Kp] -> [tm, Kp], f32 accumulation.
    y = jnp.dot(h.astype(jnp.bfloat16), w2_ref[...],
                preferred_element_type=jnp.float32)
    # bias + tanh in f32 (EUP); output tile is lane-dense (Kp = 128).
    o_ref[...] = jnp.tanh(y + b2_ref[...]).astype(o_ref.dtype)


def _round_up(n, m):
    return ((n + m - 1) // m) * m


def prepare_params(w1, b1, w2, b2):
    """One-time weight preprocessing (NOT in the per-call path).

    w1: [120, D]  fc1.weight     b1: [120]  fc1.bias
    w2: [K, 120]  fc2.weight     b2: [K]    fc2.bias

    Transposes weights to MXU-native orientation, pads hidden/output dims to
    lane-dense multiples of 128 with zeros, and casts weights to bf16.
    Biases stay f32 (bias add / activations run in f32).
    Returns:
      w1p: [D, Hp] bf16,  b1p: [1, Hp] f32,
      w2p: [Hp, Kp] bf16, b2p: [1, Kp] f32
    """
    HID, D = w1.shape
    K = w2.shape[0]
    Hp = _round_up(HID, 128)   # 120 -> 128
    Kp = _round_up(K, 128)     # 10  -> 128

    w1p = jnp.pad(w1.T, ((0, 0), (0, Hp - HID))).astype(jnp.bfloat16)           # [D, Hp]
    b1p = jnp.pad(b1.astype(jnp.float32), (0, Hp - HID)).reshape(1, Hp)          # [1, Hp]
    w2p = jnp.pad(w2.T, ((0, Hp - HID), (0, Kp - K))).astype(jnp.bfloat16)       # [Hp, Kp]
    b2p = jnp.pad(b2.astype(jnp.float32), (0, Kp - K)).reshape(1, Kp)            # [1, Kp]
    return (w1p, b1p, w2p, b2p)


def _choose_tile(B):
    """Batch-tile rows.  >=2 grid steps for non-trivial B (v7x megacore);
    cap at 512 rows so a double-buffered f32 x tile fits v5e's 16 MiB scoped
    VMEM default with plenty of headroom."""
    if B <= 16:
        return max(8, _round_up(B, 8))
    tm = _round_up((B + 1) // 2, 8)
    return min(tm, 512)


def classical_net_simple_forward(x, params, K):
    """Fused MLP forward.  x: [B, C, H, W] f32.  Returns [B, K] f32."""
    w1p, b1p, w2p, b2p = params
    D, Hp = w1p.shape
    Kp = w2p.shape[1]

    B = x.shape[0]
    # flatten exactly like torch.flatten(x, 1); stays f32 (cast happens in-kernel).
    x2d = x.reshape(B, D)

    tm = _choose_tile(B)
    Bp = _round_up(B, tm)
    if Bp != B:
        # Padded rows are garbage-free zeros; rows are independent and the
        # [:B] slice below removes them (no cross-row reductions in kernel).
        x2d = jnp.pad(x2d, ((0, Bp - B), (0, 0)))
    grid = (Bp // tm,)

    cost = pl.CostEstimate(
        flops=2 * Bp * D * Hp + 2 * Bp * Hp * Kp,
        transcendentals=Bp * Kp,
        bytes_accessed=(4 * Bp * D                 # x tiles, f32
                        + 2 * (D * Hp + Hp * Kp)   # weights, bf16 (resident)
                        + 4 * (Hp + Kp)            # biases, f32
                        + 4 * Bp * Kp),            # output, f32
    )

    out = pl.pallas_call(
        _mlp_kernel,
        out_shape=jax.ShapeDtypeStruct((Bp, Kp), jnp.float32),
        grid_spec=pltpu.PrefetchScalarGridSpec(
            num_scalar_prefetch=0,
            grid=grid,
            in_specs=[
                pl.BlockSpec((tm, D), lambda i: (i, 0)),    # x tile (f32)
                pl.BlockSpec((D, Hp), lambda i: (0, 0)),    # w1 (resident, bf16)
                pl.BlockSpec((1, Hp), lambda i: (0, 0)),    # b1
                pl.BlockSpec((Hp, Kp), lambda i: (0, 0)),   # w2 (resident, bf16)
                pl.BlockSpec((1, Kp), lambda i: (0, 0)),    # b2
            ],
            out_specs=pl.BlockSpec((tm, Kp), lambda i: (i, 0)),
        ),
        compiler_params=pltpu.CompilerParams(
            dimension_semantics=("parallel",),  # B-grid shards across v7x's 2 TCs
        ),
        cost_estimate=cost,
    )(x2d, w1p, b1p, w2p, b2p)

    # Strip batch / class padding (padded columns are exact zeros -> tanh(0)=0).
    return out[:B, :K]


def _reference_forward(x, w1, b1, w2, b2):
    """Pure-JAX f32 reference mirroring the PyTorch forward."""
    B = x.shape[0]
    x2d = x.reshape(B, -1)
    h = jnp.maximum(x2d @ w1.T + b1, 0.0)
    return jnp.tanh(h @ w2.T + b2)


if __name__ == "__main__":
    key = jax.random.PRNGKey(0)

    # Small shapes consistent with the module: x is NCHW image-like input.
    B, C, Himg, Wimg = 2, 4, 16, 16
    D = C * Himg * Wimg            # nn_input_dimensions = 1024
    HID = 120                      # fc1 output features (fixed in the module)
    K = 10                         # number of classes

    kx, k1, k2, k3, k4 = jax.random.split(key, 5)
    x = jax.random.normal(kx, (B, C, Himg, Wimg), dtype=jnp.float32)

    # Deterministic PyTorch-like init: U(-1/sqrt(fan_in), 1/sqrt(fan_in))
    bound1 = 1.0 / (D ** 0.5)
    w1 = jax.random.uniform(k1, (HID, D), jnp.float32, -bound1, bound1)
    b1 = jax.random.uniform(k2, (HID,), jnp.float32, -bound1, bound1)
    bound2 = 1.0 / (HID ** 0.5)
    w2 = jax.random.uniform(k3, (K, HID), jnp.float32, -bound2, bound2)
    b2 = jax.random.uniform(k4, (K,), jnp.float32, -bound2, bound2)

    # One-time weight prep (transpose to MXU-native, pad lane-dense, bf16).
    params = prepare_params(w1, b1, w2, b2)

    out = classical_net_simple_forward(x, params, K)
    out = jax.block_until_ready(out)

    ref = _reference_forward(x, w1, b1, w2, b2)
    assert out.shape == (B, K), out.shape
    # bf16 matmul operands with f32 accumulation -> loosened tolerance.
    assert jnp.allclose(out, ref, atol=3e-2, rtol=3e-2), "mismatch vs reference"

    print("KERNEL_OK")
</pallas_src>

<mosaic_0001>
module attributes {stable_mosaic.version = 11 : i64} {
  func.func @_mlp_kernel(%arg0: i32, %arg1: memref<8x1024xf32, #tpu.memory_space<vmem>>, %arg2: memref<1024x128xbf16, #tpu.memory_space<vmem>>, %arg3: memref<1x128xf32, #tpu.memory_space<vmem>>, %arg4: memref<128x128xbf16, #tpu.memory_space<vmem>>, %arg5: memref<1x128xf32, #tpu.memory_space<vmem>>, %arg6: memref<8x128xf32, #tpu.memory_space<vmem>>) attributes {dimension_semantics = [#tpu.dimension_semantics<parallel>], iteration_bounds = array<i64: 1>, scalar_prefetch = 0 : i64, scratch_operands = 0 : i64, tpu.core_type = #tpu.core_type<tc>, window_params = [{transform_indices = @transform_0, window_bounds = array<i64: 8, 1024>}, {pipeline_mode = #tpu.pipeline_mode<synchronous>, transform_indices = @transform_1, window_bounds = array<i64: 1024, 128>}, {pipeline_mode = #tpu.pipeline_mode<synchronous>, transform_indices = @transform_2, window_bounds = array<i64: 1, 128>}, {pipeline_mode = #tpu.pipeline_mode<synchronous>, transform_indices = @transform_3, window_bounds = array<i64: 128, 128>}, {pipeline_mode = #tpu.pipeline_mode<synchronous>, transform_indices = @transform_4, window_bounds = array<i64: 1, 128>}, {transform_indices = @transform_5, window_bounds = array<i64: 8, 128>}]} {
    %c0 = arith.constant 0 : index
    %c0_0 = arith.constant 0 : index
    %0 = vector.load %arg1[%c0, %c0_0] : memref<8x1024xf32, #tpu.memory_space<vmem>>, vector<8x1024xf32>
    %1 = arith.truncf %0 : vector<8x1024xf32> to vector<8x1024xbf16>
    %c0_1 = arith.constant 0 : index
    %c0_2 = arith.constant 0 : index
    %2 = vector.load %arg2[%c0_1, %c0_2] : memref<1024x128xbf16, #tpu.memory_space<vmem>>, vector<1024x128xbf16>
    %cst = arith.constant dense<0.000000e+00> : vector<8x128xf32>
    %3 = tpu.matmul %1, %2, %cst {dimension_numbers = #tpu.dot_dimension_numbers<[1], [0], [0], [1], [0, 0, 1, 1], [], []>} : vector<8x1024xbf16>, vector<1024x128xbf16>, vector<8x128xf32> -> vector<8x128xf32>
    %c0_3 = arith.constant 0 : index
    %c0_4 = arith.constant 0 : index
    %4 = vector.load %arg3[%c0_3, %c0_4] : memref<1x128xf32, #tpu.memory_space<vmem>>, vector<1x128xf32>
    %5 = vector.broadcast %4 : vector<1x128xf32> to vector<8x128xf32>
    %6 = arith.addf %3, %5 : vector<8x128xf32>
    %cst_5 = arith.constant 0.000000e+00 : f32
    %7 = vector.broadcast %cst_5 : f32 to vector<8x128xf32>
    %8 = arith.maximumf %6, %7 : vector<8x128xf32>
    %9 = arith.truncf %8 : vector<8x128xf32> to vector<8x128xbf16>
    %c0_6 = arith.constant 0 : index
    %c0_7 = arith.constant 0 : index
    %10 = vector.load %arg4[%c0_6, %c0_7] : memref<128x128xbf16, #tpu.memory_space<vmem>>, vector<128x128xbf16>
    %cst_8 = arith.constant dense<0.000000e+00> : vector<8x128xf32>
    %11 = tpu.matmul %9, %10, %cst_8 {dimension_numbers = #tpu.dot_dimension_numbers<[1], [0], [0], [1], [0, 0, 1, 1], [], []>} : vector<8x128xbf16>, vector<128x128xbf16>, vector<8x128xf32> -> vector<8x128xf32>
    %c0_9 = arith.constant 0 : index
    %c0_10 = arith.constant 0 : index
    %12 = vector.load %arg5[%c0_9, %c0_10] : memref<1x128xf32, #tpu.memory_space<vmem>>, vector<1x128xf32>
    %13 = vector.broadcast %12 : vector<1x128xf32> to vector<8x128xf32>
    %14 = arith.addf %11, %13 : vector<8x128xf32>
    %15 = math.tanh %14 : vector<8x128xf32>
    %c0_11 = arith.constant 0 : index
    %c0_12 = arith.constant 0 : index
    %16 = vector.load %arg6[%c0_11, %c0_12] : memref<8x128xf32, #tpu.memory_space<vmem>>, vector<8x128xf32>
    tpu.vector_store %arg6[%c0_11, %c0_12], %15 {strides = array<i32>} : memref<8x128xf32, #tpu.memory_space<vmem>>, vector<8x128xf32>,
    return
  }
  func.func @transform_0(%arg0: i32) -> (i32, i32) {
    %c0_i32 = arith.constant 0 : i32
    %c0_i32_0 = arith.constant 0 : i32
    return %arg0, %c0_i32 : i32, i32
  }
  func.func @transform_1(%arg0: i32) -> (i32, i32) {
    %c0_i32 = arith.constant 0 : i32
    %c0_i32_0 = arith.constant 0 : i32
    %c0_i32_1 = arith.constant 0 : i32
    return %c0_i32, %c0_i32_0 : i32, i32
  }
  func.func @transform_2(%arg0: i32) -> (i32, i32) {
    %c0_i32 = arith.constant 0 : i32
    %c0_i32_0 = arith.constant 0 : i32
    %c0_i32_1 = arith.constant 0 : i32
    return %c0_i32, %c0_i32_0 : i32, i32
  }
  func.func @transform_3(%arg0: i32) -> (i32, i32) {
    %c0_i32 = arith.constant 0 : i32
    %c0_i32_0 = arith.constant 0 : i32
    %c0_i32_1 = arith.constant 0 : i32
    return %c0_i32, %c0_i32_0 : i32, i32
  }
  func.func @transform_4(%arg0: i32) -> (i32, i32) {
    %c0_i32 = arith.constant 0 : i32
    %c0_i32_0 = arith.constant 0 : i32
    %c0_i32_1 = arith.constant 0 : i32
    return %c0_i32, %c0_i32_0 : i32, i32
  }
  func.func @transform_5(%arg0: i32) -> (i32, i32) {
    %c0_i32 = arith.constant 0 : i32
    %c0_i32_0 = arith.constant 0 : i32
    return %arg0, %c0_i32 : i32, i32
  }
}

</mosaic_0001>

<llo_original>
// kernel: tpu_custom_call.1
$region0: #{tpu_custom_call.1}
  #allocation0 [shape = 'u32[]', space=smem, size = 0x4, offset = 0x4, fixed_abs, tag = 'smem constant byte address 0x4 - core index']
  #allocation1 [shape = 'u32[72,128]{1,0:T(1,128)}', space=vmem, size = 0x9000, scoped, tag = 'internal scratch']
  %s0 = inlined_call_operand.hbm [shape: f32[8,1024], index: 0, kind: input, shape index: {}]
  %s1 = inlined_call_operand.hbm [shape: bf16[1024,128], index: 1, kind: input, shape index: {}]
  %s2 = inlined_call_operand.vmem [shape: f32[1,128], index: 2, kind: input, shape index: {}]
  %s3 = inlined_call_operand.hbm [shape: bf16[128,128], index: 3, kind: input, shape index: {}]
  %s4 = inlined_call_operand.vmem [shape: f32[1,128], index: 4, kind: input, shape index: {}]
  %s5 = inlined_call_operand.hbm [shape: f32[8,128], index: 5, kind: output, shape index: {}]
  %s6 = sld [smem:[#allocation0]]
  $region42: #{tpu_custom_call.1} parent=0
    _
  %s8 = ssub.s32 1, %s6
  %s9 = scalar_select 0, %s8, %s6
  $region1: #{tpu_custom_call.1} parent=0
    #allocation2 [shape = 'u8[32768]{0}', space=vmem, size = 0x8000, scoped, tag = 'input window, operand 0, single buffered']
    #allocation3 [shape = 's32[1]{0}', space=sflag, size = 0x4, scoped, tag = 'scoped memory for tpu_custom_call.1']
    #allocation4 [shape = 's32[1]{0}', space=sflag, size = 0x4, scoped, tag = 'scoped memory for tpu_custom_call.1']
    #allocation5 [shape = 'u8[262144]{0}', space=vmem, size = 0x40000, scoped, tag = 'input window, operand 1, single buffered']
    #allocation6 [shape = 's32[1]{0}', space=sflag, size = 0x4, scoped, tag = 'scoped memory for tpu_custom_call.1']
    #allocation7 [shape = 'u8[32768]{0}', space=vmem, size = 0x8000, scoped, tag = 'input window, operand 3, single buffered']
    #allocation8 [shape = 'u8[4096]{0}', space=vmem, size = 0x1000, scoped, tag = 'output window, operand 0, single buffered']
    %10 = vsyncpa [#allocation3], 0
    %11 = vsyncpa [#allocation6], 0
    %12 = vsyncpa [#allocation4], 0
    // Predicated region
    $region2: #{tpu_custom_call.1} parent=1 // pred_check
      _
    $region3: #{tpu_custom_call.1} parent=1 // pred_check_branch
      %14 = sbr.rel (0) target = $region5
    $region4: #{tpu_custom_call.1} parent=1 // pred_region
      %16 = vsyncadd [#allocation3], 0
      %s18 = sshll.u32 %s0, 4
      %s19 = int_to_ptr.hbm [resolvable:$true] %s18
      %s20 = sshll.u32 [#allocation2], 4
      %s21 = int_to_ptr.vmem [resolvable:$true] %s20
      %23 = dma.hbm_to_vmem [thread:$0]  %s19, 1024, %s21, [#allocation3]
    $region5: #{tpu_custom_call.1} parent=1 // pred_fallthru
      _
    // Predicated region
    $region6: #{tpu_custom_call.1} parent=1 // pred_check
      _
    $region7: #{tpu_custom_call.1} parent=1 // pred_check_branch
      %25 = sbr.rel (0) target = $region9
    $region8: #{tpu_custom_call.1} parent=1 // pred_region
      %27 = vsyncadd [#allocation6], 0
      %s28 = sshll.u32 %s1, 4
      %s29 = int_to_ptr.hbm [resolvable:$true] %s28
      %s30 = sshll.u32 [#allocation5], 4
      %s31 = int_to_ptr.vmem [resolvable:$true] %s30
      %36 = dma.hbm_to_vmem [thread:$0]  %s29, 8192, %s31, [#allocation6], 64, 64, 4
    $region9: #{tpu_custom_call.1} parent=1 // pred_fallthru
      _
    // Predicated region
    $region10: #{tpu_custom_call.1} parent=1 // pred_check
      _
    $region11: #{tpu_custom_call.1} parent=1 // pred_check_branch
      %38 = sbr.rel (0) target = $region13
    $region12: #{tpu_custom_call.1} parent=1 // pred_region
      _
    $region13: #{tpu_custom_call.1} parent=1 // pred_fallthru
      _
    // Predicated region
    $region14: #{tpu_custom_call.1} parent=1 // pred_check
      _
    $region15: #{tpu_custom_call.1} parent=1 // pred_check_branch
      %40 = sbr.rel (0) target = $region17
    $region16: #{tpu_custom_call.1} parent=1 // pred_region
      %42 = vsyncadd [#allocation6], 0
      %s43 = sshll.u32 %s3, 4
      %s44 = int_to_ptr.hbm [resolvable:$true] %s43
      %s45 = sshll.u32 [#allocation7], 4
      %s46 = int_to_ptr.vmem [resolvable:$true] %s45
      %51 = dma.hbm_to_vmem [thread:$0]  %s44, 1024, %s46, [#allocation6], 64, 64, 4
    $region17: #{tpu_custom_call.1} parent=1 // pred_fallthru
      _
    // Predicated region
    $region18: #{tpu_custom_call.1} parent=1 // pred_check
      _
    $region19: #{tpu_custom_call.1} parent=1 // pred_check_branch
      %53 = sbr.rel (0) target = $region21
    $region20: #{tpu_custom_call.1} parent=1 // pred_region
      _
    $region21: #{tpu_custom_call.1} parent=1 // pred_fallthru
      _
    // Predicated region
    $region22: #{tpu_custom_call.1} parent=1 // pred_check
      _
    $region23: #{tpu_custom_call.1} parent=1 // pred_check_branch
      %55 = sbr.rel (0) target = $region25
    $region24: #{tpu_custom_call.1} parent=1 // pred_region
      %57 = dma.done [#allocation3], 1024
    $region25: #{tpu_custom_call.1} parent=1 // pred_fallthru
      _
    // Predicated region
    $region26: #{tpu_custom_call.1} parent=1 // pred_check
      _
    $region27: #{tpu_custom_call.1} parent=1 // pred_check_branch
      %59 = sbr.rel (0) target = $region29
    $region28: #{tpu_custom_call.1} parent=1 // pred_region
      %61 = dma.done [#allocation6], 8192
    $region29: #{tpu_custom_call.1} parent=1 // pred_fallthru
      _
    // Predicated region
    $region30: #{tpu_custom_call.1} parent=1 // pred_check
      _
    $region31: #{tpu_custom_call.1} parent=1 // pred_check_branch
      %63 = sbr.rel (0) target = $region33
    $region32: #{tpu_custom_call.1} parent=1 // pred_region
      %65 = dma.done [#allocation6], 1024
    $region33: #{tpu_custom_call.1} parent=1 // pred_fallthru
      _
    %v66 = vld [vmem:[#allocation2] sm:$0xff]
    %v67 = vld [vmem:[#allocation2 + $0x8] sm:$0xff]
    %v68 = vld [vmem:[#allocation2 + $0x10] sm:$0xff]
    %v69 = vld [vmem:[#allocation2 + $0x18] sm:$0xff]
    %v70 = vld [vmem:[#allocation2 + $0x20] sm:$0xff]
    %v71 = vld [vmem:[#allocation2 + $0x28] sm:$0xff]
    %v72 = vld [vmem:[#allocation2 + $0x30] sm:$0xff]
    %v73 = vld [vmem:[#allocation2 + $0x38] sm:$0xff]
    %v74 = vpack.c.bf16 %v66, %v66
    %v75 = vpack.c.bf16 %v67, %v67
    %v76 = vpack.c.bf16 %v68, %v68
    %v77 = vpack.c.bf16 %v69, %v69
    %v78 = vpack.c.bf16 %v70, %v70
    %v79 = vpack.c.bf16 %v71, %v71
    %v80 = vpack.c.bf16 %v72, %v72
    %v81 = vpack.c.bf16 %v73, %v73
    %v82 = vld [vmem:[#allocation5] sm:$0xf]
    %v83 = vld [vmem:[#allocation5 + $0x4] sm:$0xf]
    %v84 = vld [vmem:[#allocation5 + $0x8] sm:$0xf]
    %v85 = vld [vmem:[#allocation5 + $0xc] sm:$0xf]
    %v86 = vld [vmem:[#allocation5 + $0x10] sm:$0xf]
    %v87 = vld [vmem:[#allocation5 + $0x14] sm:$0xf]
    %v88 = vld [vmem:[#allocation5 + $0x18] sm:$0xf]
    %v89 = vld [vmem:[#allocation5 + $0x1c] sm:$0xf]
    %v90 = vld [vmem:[#allocation5 + $0x20] sm:$0xf]
    %v91 = vld [vmem:[#allocation5 + $0x24] sm:$0xf]
    %v92 = vld [vmem:[#allocation5 + $0x28] sm:$0xf]
    %v93 = vld [vmem:[#allocation5 + $0x2c] sm:$0xf]
    %v94 = vld [vmem:[#allocation5 + $0x30] sm:$0xf]
    %v95 = vld [vmem:[#allocation5 + $0x34] sm:$0xf]
    %v96 = vld [vmem:[#allocation5 + $0x38] sm:$0xf]
    %v97 = vld [vmem:[#allocation5 + $0x3c] sm:$0xf]
    %v98 = vld [vmem:[#allocation5 + $0x40] sm:$0xf]
    %v99 = vld [vmem:[#allocation5 + $0x44] sm:$0xf]
    %v100 = vld [vmem:[#allocation5 + $0x48] sm:$0xf]
    %v101 = vld [vmem:[#allocation5 + $0x4c] sm:$0xf]
    %v102 = vld [vmem:[#allocation5 + $0x50] sm:$0xf]
    %v103 = vld [vmem:[#allocation5 + $0x54] sm:$0xf]
    %v104 = vld [vmem:[#allocation5 + $0x58] sm:$0xf]
    %v105 = vld [vmem:[#allocation5 + $0x5c] sm:$0xf]
    %v106 = vld [vmem:[#allocation5 + $0x60] sm:$0xf]
    %v107 = vld [vmem:[#allocation5 + $0x64] sm:$0xf]
    %v108 = vld [vmem:[#allocation5 + $0x68] sm:$0xf]
    %v109 = vld [vmem:[#allocation5 + $0x6c] sm:$0xf]
    %v110 = vld [vmem:[#allocation5 + $0x70] sm:$0xf]
    %v111 = vld [vmem:[#allocation5 + $0x74] sm:$0xf]
    %v112 = vld [vmem:[#allocation5 + $0x78] sm:$0xf]
    %v113 = vld [vmem:[#allocation5 + $0x7c] sm:$0xf]
    %v114 = vld [vmem:[#allocation5 + $0x80] sm:$0xf]
    %v115 = vld [vmem:[#allocation5 + $0x84] sm:$0xf]
    %v116 = vld [vmem:[#allocation5 + $0x88] sm:$0xf]
    %v117 = vld [vmem:[#allocation5 + $0x8c] sm:$0xf]
    %v118 = vld [vmem:[#allocation5 + $0x90] sm:$0xf]
    %v119 = vld [vmem:[#allocation5 + $0x94] sm:$0xf]
    %v120 = vld [vmem:[#allocation5 + $0x98] sm:$0xf]
    %v121 = vld [vmem:[#allocation5 + $0x9c] sm:$0xf]
    %v122 = vld [vmem:[#allocation5 + $0xa0] sm:$0xf]
    %v123 = vld [vmem:[#allocation5 + $0xa4] sm:$0xf]
    %v124 = vld [vmem:[#allocation5 + $0xa8] sm:$0xf]
    %v125 = vld [vmem:[#allocation5 + $0xac] sm:$0xf]
    %v126 = vld [vmem:[#allocation5 + $0xb0] sm:$0xf]
    %v127 = vld [vmem:[#allocation5 + $0xb4] sm:$0xf]
    %v128 = vld [vmem:[#allocation5 + $0xb8] sm:$0xf]
    %v129 = vld [vmem:[#allocation5 + $0xbc] sm:$0xf]
    %v130 = vld [vmem:[#allocation5 + $0xc0] sm:$0xf]
    %v131 = vld [vmem:[#allocation5 + $0xc4] sm:$0xf]
    %v132 = vld [vmem:[#allocation5 + $0xc8] sm:$0xf]
    %v133 = vld [vmem:[#allocation5 + $0xcc] sm:$0xf]
    %v134 = vld [vmem:[#allocation5 + $0xd0] sm:$0xf]
    %v135 = vld [vmem:[#allocation5 + $0xd4] sm:$0xf]
    %v136 = vld [vmem:[#allocation5 + $0xd8] sm:$0xf]
    %v137 = vld [vmem:[#allocation5 + $0xdc] sm:$0xf]
    %v138 = vld [vmem:[#allocation5 + $0xe0] sm:$0xf]
    %v139 = vld [vmem:[#allocation5 + $0xe4] sm:$0xf]
    %v140 = vld [vmem:[#allocation5 + $0xe8] sm:$0xf]
    %v141 = vld [vmem:[#allocation5 + $0xec] sm:$0xf]
    %v142 = vld [vmem:[#allocation5 + $0xf0] sm:$0xf]
    %v143 = vld [vmem:[#allocation5 + $0xf4] sm:$0xf]
    %v144 = vld [vmem:[#allocation5 + $0xf8] sm:$0xf]
    %v145 = vld [vmem:[#allocation5 + $0xfc] sm:$0xf]
    %v146 = vld [vmem:[#allocation5 + $0x100] sm:$0xf]
    %v147 = vld [vmem:[#allocation5 + $0x104] sm:$0xf]
    %v148 = vld [vmem:[#allocation5 + $0x108] sm:$0xf]
    %v149 = vld [vmem:[#allocation5 + $0x10c] sm:$0xf]
    %v150 = vld [vmem:[#allocation5 + $0x110] sm:$0xf]
    %v151 = vld [vmem:[#allocation5 + $0x114] sm:$0xf]
    %v152 = vld [vmem:[#allocation5 + $0x118] sm:$0xf]
    %v153 = vld [vmem:[#allocation5 + $0x11c] sm:$0xf]
    %v154 = vld [vmem:[#allocation5 + $0x120] sm:$0xf]
    %v155 = vld [vmem:[#allocation5 + $0x124] sm:$0xf]
    %v156 = vld [vmem:[#allocation5 + $0x128] sm:$0xf]
    %v157 = vld [vmem:[#allocation5 + $0x12c] sm:$0xf]
    %v158 = vld [vmem:[#allocation5 + $0x130] sm:$0xf]
    %v159 = vld [vmem:[#allocation5 + $0x134] sm:$0xf]
    %v160 = vld [vmem:[#allocation5 + $0x138] sm:$0xf]
    %v161 = vld [vmem:[#allocation5 + $0x13c] sm:$0xf]
    %v162 = vld [vmem:[#allocation5 + $0x140] sm:$0xf]
    %v163 = vld [vmem:[#allocation5 + $0x144] sm:$0xf]
    %v164 = vld [vmem:[#allocation5 + $0x148] sm:$0xf]
    %v165 = vld [vmem:[#allocation5 + $0x14c] sm:$0xf]
    %v166 = vld [vmem:[#allocation5 + $0x150] sm:$0xf]
    %v167 = vld [vmem:[#allocation5 + $0x154] sm:$0xf]
    %v168 = vld [vmem:[#allocation5 + $0x158] sm:$0xf]
    %v169 = vld [vmem:[#allocation5 + $0x15c] sm:$0xf]
    %v170 = vld [vmem:[#allocation5 + $0x160] sm:$0xf]
    %v171 = vld [vmem:[#allocation5 + $0x164] sm:$0xf]
    %v172 = vld [vmem:[#allocation5 + $0x168] sm:$0xf]
    %v173 = vld [vmem:[#allocation5 + $0x16c] sm:$0xf]
    %v174 = vld [vmem:[#allocation5 + $0x170] sm:$0xf]
    %v175 = vld [vmem:[#allocation5 + $0x174] sm:$0xf]
    %v176 = vld [vmem:[#allocation5 + $0x178] sm:$0xf]
    %v177 = vld [vmem:[#allocation5 + $0x17c] sm:$0xf]
    %v178 = vld [vmem:[#allocation5 + $0x180] sm:$0xf]
    %v179 = vld [vmem:[#allocation5 + $0x184] sm:$0xf]
    %v180 = vld [vmem:[#allocation5 + $0x188] sm:$0xf]
    %v181 = vld [vmem:[#allocation5 + $0x18c] sm:$0xf]
    %v182 = vld [vmem:[#allocation5 + $0x190] sm:$0xf]
    %v183 = vld [vmem:[#allocation5 + $0x194] sm:$0xf]
    %v184 = vld [vmem:[#allocation5 + $0x198] sm:$0xf]
    %v185 = vld [vmem:[#allocation5 + $0x19c] sm:$0xf]
    %v186 = vld [vmem:[#allocation5 + $0x1a0] sm:$0xf]
    %v187 = vld [vmem:[#allocation5 + $0x1a4] sm:$0xf]
    %v188 = vld [vmem:[#allocation5 + $0x1a8] sm:$0xf]
    %v189 = vld [vmem:[#allocation5 + $0x1ac] sm:$0xf]
    %v190 = vld [vmem:[#allocation5 + $0x1b0] sm:$0xf]
    %v191 = vld [vmem:[#allocation5 + $0x1b4] sm:$0xf]
    %v192 = vld [vmem:[#allocation5 + $0x1b8] sm:$0xf]
    %v193 = vld [vmem:[#allocation5 + $0x1bc] sm:$0xf]
    %v194 = vld [vmem:[#allocation5 + $0x1c0] sm:$0xf]
    %v195 = vld [vmem:[#allocation5 + $0x1c4] sm:$0xf]
    %v196 = vld [vmem:[#allocation5 + $0x1c8] sm:$0xf]
    %v197 = vld [vmem:[#allocation5 + $0x1cc] sm:$0xf]
    %v198 = vld [vmem:[#allocation5 + $0x1d0] sm:$0xf]
    %v199 = vld [vmem:[#allocation5 + $0x1d4] sm:$0xf]
    %v200 = vld [vmem:[#allocation5 + $0x1d8] sm:$0xf]
    %v201 = vld [vmem:[#allocation5 + $0x1dc] sm:$0xf]
    %v202 = vld [vmem:[#allocation5 + $0x1e0] sm:$0xf]
    %v203 = vld [vmem:[#allocation5 + $0x1e4] sm:$0xf]
    %v204 = vld [vmem:[#allocation5 + $0x1e8] sm:$0xf]
    %v205 = vld [vmem:[#allocation5 + $0x1ec] sm:$0xf]
    %v206 = vld [vmem:[#allocation5 + $0x1f0] sm:$0xf]
    %v207 = vld [vmem:[#allocation5 + $0x1f4] sm:$0xf]
    %v208 = vld [vmem:[#allocation5 + $0x1f8] sm:$0xf]
    %v209 = vld [vmem:[#allocation5 + $0x1fc] sm:$0xf]
    %v210 = vld [vmem:[%s2] sm:$0x1]
    %v212 = vperm.slane %v210, 0
    %v342 = vunpack.c.l.b16 %v82
    %v343 = vunpack.c.l.b16 %v83
    %v344 = vunpack.c.l.b16 %v84
    %v345 = vunpack.c.l.b16 %v85
    %v346 = vunpack.c.l.b16 %v86
    %v347 = vunpack.c.l.b16 %v87
    %v348 = vunpack.c.l.b16 %v88
    %v349 = vunpack.c.l.b16 %v89
    %v350 = vunpack.c.l.b16 %v90
    %v351 = vunpack.c.l.b16 %v91
    %v352 = vunpack.c.l.b16 %v92
    %v353 = vunpack.c.l.b16 %v93
    %v354 = vunpack.c.l.b16 %v94
    %v355 = vunpack.c.l.b16 %v95
    %v356 = vunpack.c.l.b16 %v96
    %v357 = vunpack.c.l.b16 %v97
    %v358 = vunpack.c.l.b16 %v98
    %v359 = vunpack.c.l.b16 %v99
    %v360 = vunpack.c.l.b16 %v100
    %v361 = vunpack.c.l.b16 %v101
    %v362 = vunpack.c.l.b16 %v102
    %v363 = vunpack.c.l.b16 %v103
    %v364 = vunpack.c.l.b16 %v104
    %v365 = vunpack.c.l.b16 %v105
    %v366 = vunpack.c.l.b16 %v106
    %v367 = vunpack.c.l.b16 %v107
    %v368 = vunpack.c.l.b16 %v108
    %v369 = vunpack.c.l.b16 %v109
    %v370 = vunpack.c.l.b16 %v110
    %v371 = vunpack.c.l.b16 %v111
    %v372 = vunpack.c.l.b16 %v112
    %v373 = vunpack.c.l.b16 %v113
    %v374 = vunpack.c.l.b16 %v114
    %v375 = vunpack.c.l.b16 %v115
    %v376 = vunpack.c.l.b16 %v116
    %v377 = vunpack.c.l.b16 %v117
    %v378 = vunpack.c.l.b16 %v118
    %v379 = vunpack.c.l.b16 %v119
    %v380 = vunpack.c.l.b16 %v120
    %v381 = vunpack.c.l.b16 %v121
    %v382 = vunpack.c.l.b16 %v122
    %v383 = vunpack.c.l.b16 %v123
    %v384 = vunpack.c.l.b16 %v124
    %v385 = vunpack.c.l.b16 %v125
    %v386 = vunpack.c.l.b16 %v126
    %v387 = vunpack.c.l.b16 %v127
    %v388 = vunpack.c.l.b16 %v128
    %v389 = vunpack.c.l.b16 %v129
    %v390 = vunpack.c.l.b16 %v130
    %v391 = vunpack.c.l.b16 %v131
    %v392 = vunpack.c.l.b16 %v132
    %v393 = vunpack.c.l.b16 %v133
    %v394 = vunpack.c.l.b16 %v134
    %v395 = vunpack.c.l.b16 %v135
    %v396 = vunpack.c.l.b16 %v136
    %v397 = vunpack.c.l.b16 %v137
    %v398 = vunpack.c.l.b16 %v138
    %v399 = vunpack.c.l.b16 %v139
    %v400 = vunpack.c.l.b16 %v140
    %v401 = vunpack.c.l.b16 %v141
    %v402 = vunpack.c.l.b16 %v142
    %v403 = vunpack.c.l.b16 %v143
    %v404 = vunpack.c.l.b16 %v144
    %v405 = vunpack.c.l.b16 %v145
    %v406 = vunpack.c.l.b16 %v146
    %v407 = vunpack.c.l.b16 %v147
    %v408 = vunpack.c.l.b16 %v148
    %v409 = vunpack.c.l.b16 %v149
    %v410 = vunpack.c.l.b16 %v150
    %v411 = vunpack.c.l.b16 %v151
    %v412 = vunpack.c.l.b16 %v152
    %v413 = vunpack.c.l.b16 %v153
    %v414 = vunpack.c.l.b16 %v154
    %v415 = vunpack.c.l.b16 %v155
    %v416 = vunpack.c.l.b16 %v156
    %v417 = vunpack.c.l.b16 %v157
    %v418 = vunpack.c.l.b16 %v158
    %v419 = vunpack.c.l.b16 %v159
    %v420 = vunpack.c.l.b16 %v160
    %v421 = vunpack.c.l.b16 %v161
    %v422 = vunpack.c.l.b16 %v162
    %v423 = vunpack.c.l.b16 %v163
    %v424 = vunpack.c.l.b16 %v164
    %v425 = vunpack.c.l.b16 %v165
    %v426 = vunpack.c.l.b16 %v166
    %v427 = vunpack.c.l.b16 %v167
    %v428 = vunpack.c.l.b16 %v168
    %v429 = vunpack.c.l.b16 %v169
    %v430 = vunpack.c.l.b16 %v170
    %v431 = vunpack.c.l.b16 %v171
    %v432 = vunpack.c.l.b16 %v172
    %v433 = vunpack.c.l.b16 %v173
    %v434 = vunpack.c.l.b16 %v174
    %v435 = vunpack.c.l.b16 %v175
    %v436 = vunpack.c.l.b16 %v176
    %v437 = vunpack.c.l.b16 %v177
    %v438 = vunpack.c.l.b16 %v178
    %v439 = vunpack.c.l.b16 %v179
    %v440 = vunpack.c.l.b16 %v180
    %v441 = vunpack.c.l.b16 %v181
    %v442 = vunpack.c.l.b16 %v182
    %v443 = vunpack.c.l.b16 %v183
    %v444 = vunpack.c.l.b16 %v184
    %v445 = vunpack.c.l.b16 %v185
    %v446 = vunpack.c.l.b16 %v186
    %v447 = vunpack.c.l.b16 %v187
    %v448 = vunpack.c.l.b16 %v188
    %v449 = vunpack.c.l.b16 %v189
    %v450 = vunpack.c.l.b16 %v190
    %v451 = vunpack.c.l.b16 %v191
    %v452 = vunpack.c.l.b16 %v192
    %v453 = vunpack.c.l.b16 %v193
    %v454 = vunpack.c.l.b16 %v194
    %v455 = vunpack.c.l.b16 %v195
    %v456 = vunpack.c.l.b16 %v196
    %v457 = vunpack.c.l.b16 %v197
    %v458 = vunpack.c.l.b16 %v198
    %v459 = vunpack.c.l.b16 %v199
    %v460 = vunpack.c.l.b16 %v200
    %v461 = vunpack.c.l.b16 %v201
    %v462 = vunpack.c.l.b16 %v202
    %v463 = vunpack.c.l.b16 %v203
    %v464 = vunpack.c.l.b16 %v204
    %v465 = vunpack.c.l.b16 %v205
    %v466 = vunpack.c.l.b16 %v206
    %v467 = vunpack.c.l.b16 %v207
    %v468 = vunpack.c.l.b16 %v208
    %v469 = vunpack.c.l.b16 %v209
    %v470 = vpack.c.b16 %v343, %v342
    %v471 = vpack.c.b16 %v345, %v344
    %v472 = vpack.c.b16 %v347, %v346
    %v473 = vpack.c.b16 %v349, %v348
    %v474 = vpack.c.b16 %v351, %v350
    %v475 = vpack.c.b16 %v353, %v352
    %v476 = vpack.c.b16 %v355, %v354
    %v477 = vpack.c.b16 %v357, %v356
    %v478 = vpack.c.b16 %v359, %v358
    %v479 = vpack.c.b16 %v361, %v360
    %v480 = vpack.c.b16 %v363, %v362
    %v481 = vpack.c.b16 %v365, %v364
    %v482 = vpack.c.b16 %v367, %v366
    %v483 = vpack.c.b16 %v369, %v368
    %v484 = vpack.c.b16 %v371, %v370
    %v485 = vpack.c.b16 %v373, %v372
    %v486 = vpack.c.b16 %v375, %v374
    %v487 = vpack.c.b16 %v377, %v376
    %v488 = vpack.c.b16 %v379, %v378
    %v489 = vpack.c.b16 %v381, %v380
    %v490 = vpack.c.b16 %v383, %v382
    %v491 = vpack.c.b16 %v385, %v384
    %v492 = vpack.c.b16 %v387, %v386
    %v493 = vpack.c.b16 %v389, %v388
    %v494 = vpack.c.b16 %v391, %v390
    %v495 = vpack.c.b16 %v393, %v392
    %v496 = vpack.c.b16 %v395, %v394
    %v497 = vpack.c.b16 %v397, %v396
    %v498 = vpack.c.b16 %v399, %v398
    %v499 = vpack.c.b16 %v401, %v400
    %v500 = vpack.c.b16 %v403, %v402
    %v501 = vpack.c.b16 %v405, %v404
    %v502 = vpack.c.b16 %v407, %v406
    %v503 = vpack.c.b16 %v409, %v408
    %v504 = vpack.c.b16 %v411, %v410
    %v505 = vpack.c.b16 %v413, %v412
    %v506 = vpack.c.b16 %v415, %v414
    %v507 = vpack.c.b16 %v417, %v416
    %v508 = vpack.c.b16 %v419, %v418
    %v509 = vpack.c.b16 %v421, %v420
    %v510 = vpack.c.b16 %v423, %v422
    %v511 = vpack.c.b16 %v425, %v424
    %v512 = vpack.c.b16 %v427, %v426
    %v513 = vpack.c.b16 %v429, %v428
    %v514 = vpack.c.b16 %v431, %v430
    %v515 = vpack.c.b16 %v433, %v432
    %v516 = vpack.c.b16 %v435, %v434
    %v517 = vpack.c.b16 %v437, %v436
    %v518 = vpack.c.b16 %v439, %v438
    %v519 = vpack.c.b16 %v441, %v440
    %v520 = vpack.c.b16 %v443, %v442
    %v521 = vpack.c.b16 %v445, %v444
    %v522 = vpack.c.b16 %v447, %v446
    %v523 = vpack.c.b16 %v449, %v448
    %v524 = vpack.c.b16 %v451, %v450
    %v525 = vpack.c.b16 %v453, %v452
    %v526 = vpack.c.b16 %v455, %v454
    %v527 = vpack.c.b16 %v457, %v456
    %v528 = vpack.c.b16 %v459, %v458
    %v529 = vpack.c.b16 %v461, %v460
    %v530 = vpack.c.b16 %v463, %v462
    %v531 = vpack.c.b16 %v465, %v464
    %v532 = vpack.c.b16 %v467, %v466
    %v533 = vpack.c.b16 %v469, %v468
    %598 = vmatpush.bf16.msra.mxu0 %v477
    %599 = vmatpush.bf16.msra.mxu0 %v476
    %600 = vmatpush.bf16.msra.mxu0 %v475
    %601 = vmatpush.bf16.msra.mxu0 %v474
    %602 = vmatpush.bf16.msra.mxu0 %v473
    %603 = vmatpush.bf16.msra.mxu0 %v472
    %604 = vmatpush.bf16.msra.mxu0 %v471
    %605 = vmatpush.bf16.msra.mxu0 %v470
    %606 = vmatmul.bf16.gmra.mxu0 %v74
    %v607 = vpop.f32.mrf.mxu0
    %v608 = vadd.f32 %v212, %v607
    %v609 = vpop.f32.mrf.mxu0
    %610 = vdwg.mxu0
    %611 = vmatpush.bf16.msra.mxu0 %v485
    %612 = vmatpush.bf16.msra.mxu0 %v484
    %613 = vmatpush.bf16.msra.mxu0 %v483
    %614 = vmatpush.bf16.msra.mxu0 %v482
    %615 = vmatpush.bf16.msra.mxu0 %v481
    %616 = vmatpush.bf16.msra.mxu0 %v480
    %617 = vmatpush.bf16.msra.mxu0 %v479
    %618 = vmatpush.bf16.msra.mxu0 %v478
    %619 = vmatmul.bf16.gmra.mxu0 %v75
    %v620 = vpop.f32.mrf.mxu0
    %v621 = vadd.f32 %v608, %v620
    %v622 = vpop.f32.mrf.mxu0
    %623 = vdwg.mxu0
    %624 = vmatpush.bf16.msra.mxu0 %v493
    %625 = vmatpush.bf16.msra.mxu0 %v492
    %626 = vmatpush.bf16.msra.mxu0 %v491
    %627 = vmatpush.bf16.msra.mxu0 %v490
    %628 = vmatpush.bf16.msra.mxu0 %v489
    %629 = vmatpush.bf16.msra.mxu0 %v488
    %630 = vmatpush.bf16.msra.mxu0 %v487
    %631 = vmatpush.bf16.msra.mxu0 %v486
    %632 = vmatmul.bf16.gmra.mxu0 %v76
    %v633 = vpop.f32.mrf.mxu0
    %v634 = vadd.f32 %v621, %v633
    %v635 = vpop.f32.mrf.mxu0
    %636 = vdwg.mxu0
    %637 = vmatpush.bf16.msra.mxu0 %v501
    %638 = vmatpush.bf16.msra.mxu0 %v500
    %639 = vmatpush.bf16.msra.mxu0 %v499
    %640 = vmatpush.bf16.msra.mxu0 %v498
    %641 = vmatpush.bf16.msra.mxu0 %v497
    %642 = vmatpush.bf16.msra.mxu0 %v496
    %643 = vmatpush.bf16.msra.mxu0 %v495
    %644 = vmatpush.bf16.msra.mxu0 %v494
    %645 = vmatmul.bf16.gmra.mxu0 %v77
    %v646 = vpop.f32.mrf.mxu0
    %v647 = vadd.f32 %v634, %v646
    %v648 = vpop.f32.mrf.mxu0
    %649 = vdwg.mxu0
    %650 = vmatpush.bf16.msra.mxu0 %v509
    %651 = vmatpush.bf16.msra.mxu0 %v508
    %652 = vmatpush.bf16.msra.mxu0 %v507
    %653 = vmatpush.bf16.msra.mxu0 %v506
    %654 = vmatpush.bf16.msra.mxu0 %v505
    %655 = vmatpush.bf16.msra.mxu0 %v504
    %656 = vmatpush.bf16.msra.mxu0 %v503
    %657 = vmatpush.bf16.msra.mxu0 %v502
    %658 = vmatmul.bf16.gmra.mxu0 %v78
    %v659 = vpop.f32.mrf.mxu0
    %v660 = vadd.f32 %v647, %v659
    %v661 = vpop.f32.mrf.mxu0
    %662 = vdwg.mxu0
    %663 = vmatpush.bf16.msra.mxu0 %v517
    %664 = vmatpush.bf16.msra.mxu0 %v516
    %665 = vmatpush.bf16.msra.mxu0 %v515
    %666 = vmatpush.bf16.msra.mxu0 %v514
    %667 = vmatpush.bf16.msra.mxu0 %v513
    %668 = vmatpush.bf16.msra.mxu0 %v512
    %669 = vmatpush.bf16.msra.mxu0 %v511
    %670 = vmatpush.bf16.msra.mxu0 %v510
    %671 = vmatmul.bf16.gmra.mxu0 %v79
    %v672 = vpop.f32.mrf.mxu0
    %v673 = vadd.f32 %v660, %v672
    %v674 = vpop.f32.mrf.mxu0
    %675 = vdwg.mxu0
    %676 = vmatpush.bf16.msra.mxu0 %v525
    %677 = vmatpush.bf16.msra.mxu0 %v524
    %678 = vmatpush.bf16.msra.mxu0 %v523
    %679 = vmatpush.bf16.msra.mxu0 %v522
    %680 = vmatpush.bf16.msra.mxu0 %v521
    %681 = vmatpush.bf16.msra.mxu0 %v520
    %682 = vmatpush.bf16.msra.mxu0 %v519
    %683 = vmatpush.bf16.msra.mxu0 %v518
    %684 = vmatmul.bf16.gmra.mxu0 %v80
    %v685 = vpop.f32.mrf.mxu0
    %v686 = vadd.f32 %v673, %v685
    %v687 = vpop.f32.mrf.mxu0
    %688 = vdwg.mxu0
    %689 = vmatpush.bf16.msra.mxu0 %v533
    %690 = vmatpush.bf16.msra.mxu0 %v532
    %691 = vmatpush.bf16.msra.mxu0 %v531
    %692 = vmatpush.bf16.msra.mxu0 %v530
    %693 = vmatpush.bf16.msra.mxu0 %v529
    %694 = vmatpush.bf16.msra.mxu0 %v528
    %695 = vmatpush.bf16.msra.mxu0 %v527
    %696 = vmatpush.bf16.msra.mxu0 %v526
    %697 = vmatmul.bf16.gmra.mxu0 %v81
    %v698 = vpop.f32.mrf.mxu0
    %v699 = vadd.f32 %v686, %v698
    %v700 = vpop.f32.mrf.mxu0
    %701 = vdwg.mxu0
    %v702 = vmax.f32 %v699, 0.0
    %v703 = vpack.c.bf16 %v702, %v702
    %v704 = vld [vmem:[#allocation7] sm:$0xf]
    %v705 = vld [vmem:[#allocation7 + $0x4] sm:$0xf]
    %v706 = vld [vmem:[#allocation7 + $0x8] sm:$0xf]
    %v707 = vld [vmem:[#allocation7 + $0xc] sm:$0xf]
    %v708 = vld [vmem:[#allocation7 + $0x10] sm:$0xf]
    %v709 = vld [vmem:[#allocation7 + $0x14] sm:$0xf]
    %v710 = vld [vmem:[#allocation7 + $0x18] sm:$0xf]
    %v711 = vld [vmem:[#allocation7 + $0x1c] sm:$0xf]
    %v712 = vld [vmem:[#allocation7 + $0x20] sm:$0xf]
    %v713 = vld [vmem:[#allocation7 + $0x24] sm:$0xf]
    %v714 = vld [vmem:[#allocation7 + $0x28] sm:$0xf]
    %v715 = vld [vmem:[#allocation7 + $0x2c] sm:$0xf]
    %v716 = vld [vmem:[#allocation7 + $0x30] sm:$0xf]
    %v717 = vld [vmem:[#allocation7 + $0x34] sm:$0xf]
    %v718 = vld [vmem:[#allocation7 + $0x38] sm:$0xf]
    %v719 = vld [vmem:[#allocation7 + $0x3c] sm:$0xf]
    %v720 = vld [vmem:[%s4] sm:$0x1]
    %v722 = vperm.slane %v720, 0
    %v740 = vunpack.c.l.b16 %v704
    %v741 = vunpack.c.l.b16 %v705
    %v742 = vunpack.c.l.b16 %v706
    %v743 = vunpack.c.l.b16 %v707
    %v744 = vunpack.c.l.b16 %v708
    %v745 = vunpack.c.l.b16 %v709
    %v746 = vunpack.c.l.b16 %v710
    %v747 = vunpack.c.l.b16 %v711
    %v748 = vunpack.c.l.b16 %v712
    %v749 = vunpack.c.l.b16 %v713
    %v750 = vunpack.c.l.b16 %v714
    %v751 = vunpack.c.l.b16 %v715
    %v752 = vunpack.c.l.b16 %v716
    %v753 = vunpack.c.l.b16 %v717
    %v754 = vunpack.c.l.b16 %v718
    %v755 = vunpack.c.l.b16 %v719
    %v756 = vpack.c.b16 %v741, %v740
    %v757 = vpack.c.b16 %v743, %v742
    %v758 = vpack.c.b16 %v745, %v744
    %v759 = vpack.c.b16 %v747, %v746
    %v760 = vpack.c.b16 %v749, %v748
    %v761 = vpack.c.b16 %v751, %v750
    %v762 = vpack.c.b16 %v753, %v752
    %v763 = vpack.c.b16 %v755, %v754
    %772 = vmatpush.bf16.msra.mxu0 %v763
    %773 = vmatpush.bf16.msra.mxu0 %v762
    %774 = vmatpush.bf16.msra.mxu0 %v761
    %775 = vmatpush.bf16.msra.mxu0 %v760
    %776 = vmatpush.bf16.msra.mxu0 %v759
    %777 = vmatpush.bf16.msra.mxu0 %v758
    %778 = vmatpush.bf16.msra.mxu0 %v757
    %779 = vmatpush.bf16.msra.mxu0 %v756
    %780 = vmatmul.bf16.gmra.mxu0 %v703
    %v781 = vpop.f32.mrf.mxu0
    %v782 = vadd.f32 %v722, %v781
    %v783 = vpop.f32.mrf.mxu0
    %784 = vdwg.mxu0
    %v785 = vtanh.pop %v782
    %786 = vst [vmem:[#allocation8] sm:$0xff] %v785
    // Predicated region
    $region34: #{tpu_custom_call.1} parent=1 // pred_check
      _
    $region35: #{tpu_custom_call.1} parent=1 // pred_check_branch
      %788 = sbr.rel (0) target = $region37
    $region36: #{tpu_custom_call.1} parent=1 // pred_region
      %790 = vsyncadd [#allocation4], 0
      %s792 = sshll.u32 [#allocation8], 4
      %s793 = int_to_ptr.vmem [resolvable:$true] %s792
      %s794 = sshll.u32 %s5, 4
      %s795 = int_to_ptr.hbm [resolvable:$true] %s794
      %797 = dma.vmem_to_hbm [thread:$0]  %s793, 128, %s795, [#allocation4]
    $region37: #{tpu_custom_call.1} parent=1 // pred_fallthru
      _
    // Predicated region
    $region38: #{tpu_custom_call.1} parent=1 // pred_check
      _
    $region39: #{tpu_custom_call.1} parent=1 // pred_check_branch
      %799 = sbr.rel (0) target = $region41
    $region40: #{tpu_custom_call.1} parent=1 // pred_region
      %801 = dma.done [#allocation4], 128
    $region41: #{tpu_custom_call.1} parent=1 // pred_fallthru
      _
    %802 = vsyncpa [#allocation3], 1
    %803 = vsyncpa [#allocation6], 1
    %804 = vsyncpa [#allocation4], 1

</llo_original>
